<compile_context>
chip_gen: v7x
topology: tpu7x:2x2x1
jax: 0.10.0
libtpu: 0.0.40
codegen_flags: <defaults>
</compile_context>

<pallas_src>
import jax
import jax.numpy as jnp
from jax.experimental import pallas as pl
from jax.experimental.pallas import tpu as pltpu


_LANE = 128


def _round_up(n, m):
    return ((n + m - 1) // m) * m


def _cdiv(a, b):
    return (a + b - 1) // b


def _actor_kernel(scale_ref, x_ref, w1_ref, b1_ref, w2_ref, b2_ref,
                  w3_ref, b3_ref, w4_ref, b4_ref, o_ref):
    bound = scale_ref[0, 0]

    # x arrives already bf16; all matmuls are bf16 x bf16 -> f32 accumulation,
    # bias-add / relu / tanh stay in f32.
    x = x_ref[...]

    h1 = jnp.dot(x, w1_ref[...], preferred_element_type=jnp.float32) + b1_ref[...]
    h1 = jnp.maximum(h1, 0.0)

    h2 = jnp.dot(h1.astype(jnp.bfloat16), w2_ref[...],
                 preferred_element_type=jnp.float32) + b2_ref[...]
    h2 = jnp.maximum(h2, 0.0)

    h3 = jnp.dot(h2.astype(jnp.bfloat16), w3_ref[...],
                 preferred_element_type=jnp.float32) + b3_ref[...]
    h3 = jnp.maximum(h3, 0.0)

    logits = jnp.dot(h3.astype(jnp.bfloat16), w4_ref[...],
                     preferred_element_type=jnp.float32) + b4_ref[...]
    o_ref[...] = (jnp.tanh(logits) * bound).astype(o_ref.dtype)


def actor_forward(x, kparams, action_bound, *, max_tile_b=1024):
    """x: (batch, obs_dim) f32 (or bf16).  kparams: kernel params from
    pad_params_for_kernel (bf16 weights (in, out), f32 biases (1, out);
    hidden dims 128-padded, obs_dim / action_dim left unpadded).
    Returns (batch, action_dim) f32."""
    batch, obs_dim = x.shape
    assert kparams["w1"].shape[0] == obs_dim, (kparams["w1"].shape, obs_dim)
    action_dim = kparams["w4"].shape[1]

    # --- tile selection --------------------------------------------------
    # Minimize tail waste: pick num_tiles first, then the smallest 16-aligned
    # tile that covers the batch (16-row alignment keeps bf16 sublane packing
    # clean).  Force >=2 grid steps for large batches so v7x's second
    # TensorCore is used.
    num_tiles = _cdiv(batch, max_tile_b)
    if batch >= max_tile_b:
        num_tiles = max(num_tiles, 2)
    tile_b = _round_up(_cdiv(batch, num_tiles), 16)
    batch_p = tile_b * num_tiles

    # --- inputs ----------------------------------------------------------
    # Cast to bf16 at the boundary (the kernel downcasts before the MXU
    # anyway, so numerics are identical) and pad only the (narrow) batch tail.
    x_in = x.astype(jnp.bfloat16)
    if batch_p != batch:
        x_in = jnp.pad(x_in, ((0, batch_p - batch), (0, 0)))
    scale = jnp.full((1, 1), action_bound, dtype=jnp.float32)

    def _resident(shape):
        # Full-array block with a constant index_map: DMA'd once, then stays
        # VMEM-resident across all batch grid steps.
        return pl.BlockSpec(shape, lambda i: (0, 0))

    out = pl.pallas_call(
        _actor_kernel,
        out_shape=jax.ShapeDtypeStruct((batch_p, action_dim), jnp.float32),
        grid=(num_tiles,),
        in_specs=[
            pl.BlockSpec(memory_space=pltpu.MemorySpace.SMEM),    # action bound
            pl.BlockSpec((tile_b, obs_dim), lambda i: (i, 0)),    # x (pipelined)
            _resident(kparams["w1"].shape), _resident(kparams["b1"].shape),
            _resident(kparams["w2"].shape), _resident(kparams["b2"].shape),
            _resident(kparams["w3"].shape), _resident(kparams["b3"].shape),
            _resident(kparams["w4"].shape), _resident(kparams["b4"].shape),
        ],
        out_specs=pl.BlockSpec((tile_b, action_dim), lambda i: (i, 0)),
        compiler_params=pltpu.CompilerParams(
            dimension_semantics=("parallel",),
            vmem_limit_bytes=32 * 1024 * 1024),
    )(scale, x_in,
      kparams["w1"], kparams["b1"],
      kparams["w2"], kparams["b2"],
      kparams["w3"], kparams["b3"],
      kparams["w4"], kparams["b4"])

    # Only trim the (narrow, action_dim-wide) batch-tail rows when padding
    # was actually added.
    return out if batch_p == batch else out[:batch]


def init_actor_params(key, obs_dim, action_dim):
    """nn.Linear default init (uniform(+-1/sqrt(fan_in))); weights stored (in, out)."""
    dims = [(obs_dim, 400), (400, 300), (300, 10), (10, action_dim)]
    params = {}
    for i, (fan_in, fan_out) in enumerate(dims, start=1):
        key, kw, kb = jax.random.split(key, 3)
        bound = 1.0 / jnp.sqrt(fan_in)
        params[f"w{i}"] = jax.random.uniform(
            kw, (fan_in, fan_out), jnp.float32, minval=-bound, maxval=bound)
        # bias kept 2D (1, out) so it lives on the lane axis and broadcasts cleanly.
        params[f"b{i}"] = jax.random.uniform(
            kb, (1, fan_out), jnp.float32, minval=-bound, maxval=bound)
    return params


def pad_params_for_kernel(params):
    """Zero-pad the *hidden* feature dims to multiples of 128 and cast weights
    to bf16.  The layer-1 input dim (obs_dim) and layer-4 output dim
    (action_dim) are left unpadded so the streamed x / output arrays are not
    lane-padded in HBM.  Zero padding is semantics-preserving: padded columns
    get bias 0 -> relu(0)=0 and feed zero rows of the next weight."""
    pad_in = {1: False, 2: True, 3: True, 4: True}
    pad_out = {1: True, 2: True, 3: True, 4: False}
    kparams = {}
    for i in range(1, 5):
        w = params[f"w{i}"]
        b = params[f"b{i}"]
        in_p = _round_up(w.shape[0], _LANE) if pad_in[i] else w.shape[0]
        out_p = _round_up(w.shape[1], _LANE) if pad_out[i] else w.shape[1]
        kparams[f"w{i}"] = jnp.pad(
            w, ((0, in_p - w.shape[0]), (0, out_p - w.shape[1]))
        ).astype(jnp.bfloat16)
        kparams[f"b{i}"] = jnp.pad(
            b, ((0, 0), (0, out_p - b.shape[1]))
        ).astype(jnp.float32)
    return kparams


def actor_reference_f32(x, params, action_bound):
    """Pure f32 reference (the original module semantics)."""
    h = jnp.maximum(x @ params["w1"] + params["b1"], 0.0)
    h = jnp.maximum(h @ params["w2"] + params["b2"], 0.0)
    h = jnp.maximum(h @ params["w3"] + params["b3"], 0.0)
    return jnp.tanh(h @ params["w4"] + params["b4"]) * action_bound


def actor_reference_bf16(x, params, action_bound):
    """Reference that emulates the kernel's bf16 MXU-operand rounding."""
    def q(a):
        return a.astype(jnp.bfloat16).astype(jnp.float32)
    h = q(x)
    h = jnp.maximum(jnp.dot(h, q(params["w1"])) + params["b1"], 0.0)
    h = jnp.maximum(jnp.dot(q(h), q(params["w2"])) + params["b2"], 0.0)
    h = jnp.maximum(jnp.dot(q(h), q(params["w3"])) + params["b3"], 0.0)
    return jnp.tanh(jnp.dot(q(h), q(params["w4"])) + params["b4"]) * action_bound


if __name__ == "__main__":
    key = jax.random.PRNGKey(0)
    key, k_obs = jax.random.split(key)

    batch = 2
    obs_dim = 16           # args.obs_shape[agent_id]
    action_dim = 4         # args.action_dim
    action_bound_hi = 2.0  # args.action_bound[1]

    params = init_actor_params(key, obs_dim, action_dim)
    kparams = pad_params_for_kernel(params)
    x = jax.random.normal(k_obs, (batch, obs_dim), dtype=jnp.float32)

    out = actor_forward(x, kparams, action_bound_hi)
    out = jax.block_until_ready(out)

    ref_q = actor_reference_bf16(x, params, action_bound_hi)
    ref_f = actor_reference_f32(x, params, action_bound_hi)

    assert out.shape == (batch, action_dim), out.shape
    # Tight check vs. a reference with the same bf16 operand rounding.
    assert jnp.allclose(out, ref_q, atol=1e-2), (out, ref_q)
    # Looser check vs. the pure-f32 module semantics (bf16 quantization error).
    assert jnp.allclose(out, ref_f, atol=5e-2), (out, ref_f)

    # Exercise the multi-tile / tail-padding path (grid > 1, batch not a
    # multiple of the tile) with a tiny forced tile size.
    key, k_big = jax.random.split(key)
    x_big = jax.random.normal(k_big, (50, obs_dim), dtype=jnp.float32)
    out_big = jax.block_until_ready(
        actor_forward(x_big, kparams, action_bound_hi, max_tile_b=16))
    ref_big = actor_reference_bf16(x_big, params, action_bound_hi)
    assert out_big.shape == (50, action_dim), out_big.shape
    assert jnp.allclose(out_big, ref_big, atol=1e-2)

    print("KERNEL_OK")
</pallas_src>

<mosaic_0001>
module attributes {stable_mosaic.version = 11 : i64} {
  func.func @_actor_kernel(%arg0: i32, %arg1: memref<1x1xf32, #tpu.memory_space<smem>>, %arg2: memref<16x16xbf16, #tpu.memory_space<vmem>>, %arg3: memref<16x512xbf16, #tpu.memory_space<vmem>>, %arg4: memref<1x512xf32, #tpu.memory_space<vmem>>, %arg5: memref<512x384xbf16, #tpu.memory_space<vmem>>, %arg6: memref<1x384xf32, #tpu.memory_space<vmem>>, %arg7: memref<384x128xbf16, #tpu.memory_space<vmem>>, %arg8: memref<1x128xf32, #tpu.memory_space<vmem>>, %arg9: memref<128x4xbf16, #tpu.memory_space<vmem>>, %arg10: memref<1x4xf32, #tpu.memory_space<vmem>>, %arg11: memref<16x4xf32, #tpu.memory_space<vmem>>) attributes {dimension_semantics = [#tpu.dimension_semantics<parallel>], iteration_bounds = array<i64: 1>, scalar_prefetch = 0 : i64, scratch_operands = 0 : i64, tpu.core_type = #tpu.core_type<tc>, window_params = [{transform_indices = @transform_0, window_bounds = array<i64: 1, 1>}, {transform_indices = @transform_1, window_bounds = array<i64: 16, 16>}, {pipeline_mode = #tpu.pipeline_mode<synchronous>, transform_indices = @transform_2, window_bounds = array<i64: 16, 512>}, {pipeline_mode = #tpu.pipeline_mode<synchronous>, transform_indices = @transform_3, window_bounds = array<i64: 1, 512>}, {pipeline_mode = #tpu.pipeline_mode<synchronous>, transform_indices = @transform_4, window_bounds = array<i64: 512, 384>}, {pipeline_mode = #tpu.pipeline_mode<synchronous>, transform_indices = @transform_5, window_bounds = array<i64: 1, 384>}, {pipeline_mode = #tpu.pipeline_mode<synchronous>, transform_indices = @transform_6, window_bounds = array<i64: 384, 128>}, {pipeline_mode = #tpu.pipeline_mode<synchronous>, transform_indices = @transform_7, window_bounds = array<i64: 1, 128>}, {pipeline_mode = #tpu.pipeline_mode<synchronous>, transform_indices = @transform_8, window_bounds = array<i64: 128, 4>}, {pipeline_mode = #tpu.pipeline_mode<synchronous>, transform_indices = @transform_9, window_bounds = array<i64: 1, 4>}, {transform_indices = @transform_10, window_bounds = array<i64: 16, 4>}]} {
    %c0 = arith.constant 0 : index
    %c0_0 = arith.constant 0 : index
    %0 = memref.load %arg1[%c0, %c0_0] : memref<1x1xf32, #tpu.memory_space<smem>>
    %c0_1 = arith.constant 0 : index
    %c0_2 = arith.constant 0 : index
    %1 = vector.load %arg2[%c0_1, %c0_2] : memref<16x16xbf16, #tpu.memory_space<vmem>>, vector<16x16xbf16>
    %c0_3 = arith.constant 0 : index
    %c0_4 = arith.constant 0 : index
    %2 = vector.load %arg3[%c0_3, %c0_4] : memref<16x512xbf16, #tpu.memory_space<vmem>>, vector<16x512xbf16>
    %cst = arith.constant dense<0.000000e+00> : vector<16x512xf32>
    %3 = tpu.matmul %1, %2, %cst {dimension_numbers = #tpu.dot_dimension_numbers<[1], [0], [0], [1], [0, 0, 1, 1], [], []>} : vector<16x16xbf16>, vector<16x512xbf16>, vector<16x512xf32> -> vector<16x512xf32>
    %c0_5 = arith.constant 0 : index
    %c0_6 = arith.constant 0 : index
    %4 = vector.load %arg4[%c0_5, %c0_6] : memref<1x512xf32, #tpu.memory_space<vmem>>, vector<1x512xf32>
    %5 = vector.broadcast %4 : vector<1x512xf32> to vector<16x512xf32>
    %6 = arith.addf %3, %5 : vector<16x512xf32>
    %cst_7 = arith.constant 0.000000e+00 : f32
    %7 = vector.broadcast %cst_7 : f32 to vector<16x512xf32>
    %8 = arith.maximumf %6, %7 : vector<16x512xf32>
    %9 = arith.truncf %8 : vector<16x512xf32> to vector<16x512xbf16>
    %c0_8 = arith.constant 0 : index
    %c0_9 = arith.constant 0 : index
    %10 = vector.load %arg5[%c0_8, %c0_9] : memref<512x384xbf16, #tpu.memory_space<vmem>>, vector<512x384xbf16>
    %cst_10 = arith.constant dense<0.000000e+00> : vector<16x384xf32>
    %11 = tpu.matmul %9, %10, %cst_10 {dimension_numbers = #tpu.dot_dimension_numbers<[1], [0], [0], [1], [0, 0, 1, 1], [], []>} : vector<16x512xbf16>, vector<512x384xbf16>, vector<16x384xf32> -> vector<16x384xf32>
    %c0_11 = arith.constant 0 : index
    %c0_12 = arith.constant 0 : index
    %12 = vector.load %arg6[%c0_11, %c0_12] : memref<1x384xf32, #tpu.memory_space<vmem>>, vector<1x384xf32>
    %13 = vector.broadcast %12 : vector<1x384xf32> to vector<16x384xf32>
    %14 = arith.addf %11, %13 : vector<16x384xf32>
    %cst_13 = arith.constant 0.000000e+00 : f32
    %15 = vector.broadcast %cst_13 : f32 to vector<16x384xf32>
    %16 = arith.maximumf %14, %15 : vector<16x384xf32>
    %17 = arith.truncf %16 : vector<16x384xf32> to vector<16x384xbf16>
    %c0_14 = arith.constant 0 : index
    %c0_15 = arith.constant 0 : index
    %18 = vector.load %arg7[%c0_14, %c0_15] : memref<384x128xbf16, #tpu.memory_space<vmem>>, vector<384x128xbf16>
    %cst_16 = arith.constant dense<0.000000e+00> : vector<16x128xf32>
    %19 = tpu.matmul %17, %18, %cst_16 {dimension_numbers = #tpu.dot_dimension_numbers<[1], [0], [0], [1], [0, 0, 1, 1], [], []>} : vector<16x384xbf16>, vector<384x128xbf16>, vector<16x128xf32> -> vector<16x128xf32>
    %c0_17 = arith.constant 0 : index
    %c0_18 = arith.constant 0 : index
    %20 = vector.load %arg8[%c0_17, %c0_18] : memref<1x128xf32, #tpu.memory_space<vmem>>, vector<1x128xf32>
    %21 = vector.broadcast %20 : vector<1x128xf32> to vector<16x128xf32>
    %22 = arith.addf %19, %21 : vector<16x128xf32>
    %cst_19 = arith.constant 0.000000e+00 : f32
    %23 = vector.broadcast %cst_19 : f32 to vector<16x128xf32>
    %24 = arith.maximumf %22, %23 : vector<16x128xf32>
    %25 = arith.truncf %24 : vector<16x128xf32> to vector<16x128xbf16>
    %c0_20 = arith.constant 0 : index
    %c0_21 = arith.constant 0 : index
    %26 = vector.load %arg9[%c0_20, %c0_21] : memref<128x4xbf16, #tpu.memory_space<vmem>>, vector<128x4xbf16>
    %cst_22 = arith.constant dense<0.000000e+00> : vector<16x4xf32>
    %27 = tpu.matmul %25, %26, %cst_22 {dimension_numbers = #tpu.dot_dimension_numbers<[1], [0], [0], [1], [0, 0, 1, 1], [], []>} : vector<16x128xbf16>, vector<128x4xbf16>, vector<16x4xf32> -> vector<16x4xf32>
    %c0_23 = arith.constant 0 : index
    %c0_24 = arith.constant 0 : index
    %28 = vector.load %arg10[%c0_23, %c0_24] : memref<1x4xf32, #tpu.memory_space<vmem>>, vector<1x4xf32>
    %29 = vector.broadcast %28 : vector<1x4xf32> to vector<16x4xf32>
    %30 = arith.addf %27, %29 : vector<16x4xf32>
    %31 = math.tanh %30 : vector<16x4xf32>
    %32 = vector.broadcast %0 : f32 to vector<16x4xf32>
    %33 = arith.mulf %31, %32 : vector<16x4xf32>
    %c0_25 = arith.constant 0 : index
    %c0_26 = arith.constant 0 : index
    %34 = vector.load %arg11[%c0_25, %c0_26] : memref<16x4xf32, #tpu.memory_space<vmem>>, vector<16x4xf32>
    tpu.vector_store %arg11[%c0_25, %c0_26], %33 {strides = array<i32>} : memref<16x4xf32, #tpu.memory_space<vmem>>, vector<16x4xf32>,
    return
  }
  func.func @transform_0(%arg0: i32) -> (i32, i32) {
    %c0_i32 = arith.constant 0 : i32
    %c0_i32_0 = arith.constant 0 : i32
    %c0_i32_1 = arith.constant 0 : i32
    return %c0_i32, %c0_i32_0 : i32, i32
  }
  func.func @transform_1(%arg0: i32) -> (i32, i32) {
    %c0_i32 = arith.constant 0 : i32
    %c0_i32_0 = arith.constant 0 : i32
    return %arg0, %c0_i32 : i32, i32
  }
  func.func @transform_2(%arg0: i32) -> (i32, i32) {
    %c0_i32 = arith.constant 0 : i32
    %c0_i32_0 = arith.constant 0 : i32
    %c0_i32_1 = arith.constant 0 : i32
    return %c0_i32, %c0_i32_0 : i32, i32
  }
  func.func @transform_3(%arg0: i32) -> (i32, i32) {
    %c0_i32 = arith.constant 0 : i32
    %c0_i32_0 = arith.constant 0 : i32
    %c0_i32_1 = arith.constant 0 : i32
    return %c0_i32, %c0_i32_0 : i32, i32
  }
  func.func @transform_4(%arg0: i32) -> (i32, i32) {
    %c0_i32 = arith.constant 0 : i32
    %c0_i32_0 = arith.constant 0 : i32
    %c0_i32_1 = arith.constant 0 : i32
    return %c0_i32, %c0_i32_0 : i32, i32
  }
  func.func @transform_5(%arg0: i32) -> (i32, i32) {
    %c0_i32 = arith.constant 0 : i32
    %c0_i32_0 = arith.constant 0 : i32
    %c0_i32_1 = arith.constant 0 : i32
    return %c0_i32, %c0_i32_0 : i32, i32
  }
  func.func @transform_6(%arg0: i32) -> (i32, i32) {
    %c0_i32 = arith.constant 0 : i32
    %c0_i32_0 = arith.constant 0 : i32
    %c0_i32_1 = arith.constant 0 : i32
    return %c0_i32, %c0_i32_0 : i32, i32
  }
  func.func @transform_7(%arg0: i32) -> (i32, i32) {
    %c0_i32 = arith.constant 0 : i32
    %c0_i32_0 = arith.constant 0 : i32
    %c0_i32_1 = arith.constant 0 : i32
    return %c0_i32, %c0_i32_0 : i32, i32
  }
  func.func @transform_8(%arg0: i32) -> (i32, i32) {
    %c0_i32 = arith.constant 0 : i32
    %c0_i32_0 = arith.constant 0 : i32
    %c0_i32_1 = arith.constant 0 : i32
    return %c0_i32, %c0_i32_0 : i32, i32
  }
  func.func @transform_9(%arg0: i32) -> (i32, i32) {
    %c0_i32 = arith.constant 0 : i32
    %c0_i32_0 = arith.constant 0 : i32
    %c0_i32_1 = arith.constant 0 : i32
    return %c0_i32, %c0_i32_0 : i32, i32
  }
  func.func @transform_10(%arg0: i32) -> (i32, i32) {
    %c0_i32 = arith.constant 0 : i32
    %c0_i32_0 = arith.constant 0 : i32
    return %arg0, %c0_i32 : i32, i32
  }
}

</mosaic_0001>

<llo_original>
// kernel: tpu_custom_call.1
$region0: #{tpu_custom_call.1}
  #allocation0 [shape = 'u32[]', space=smem, size = 0x4, offset = 0x4, fixed_abs, tag = 'smem constant byte address 0x4 - core index']
  #allocation1 [shape = 'u32[144,128]{1,0:T(1,128)}', space=vmem, size = 0x12000, scoped, tag = 'internal scratch']
  #allocation2 [shape = 'f32[1,1]{1,0:T(1,128)S(6)}', space=smem, size = 0x200, scoped, tag = 'scoped memory for tpu_custom_call.1']
  %s0 = inlined_call_operand.<no memory space> [shape: f32[1,1], index: 0, kind: input, shape index: {}]
  %s1 = inlined_call_operand.vmem [shape: bf16[16,16], index: 1, kind: input, shape index: {}]
  %s2 = inlined_call_operand.vmem [shape: bf16[16,512], index: 2, kind: input, shape index: {}]
  %s3 = inlined_call_operand.vmem [shape: f32[1,512], index: 3, kind: input, shape index: {}]
  %s4 = inlined_call_operand.hbm [shape: bf16[512,384], index: 4, kind: input, shape index: {}]
  %s5 = inlined_call_operand.vmem [shape: f32[1,384], index: 5, kind: input, shape index: {}]
  %s6 = inlined_call_operand.hbm [shape: bf16[384,128], index: 6, kind: input, shape index: {}]
  %s7 = inlined_call_operand.vmem [shape: f32[1,128], index: 7, kind: input, shape index: {}]
  %s8 = inlined_call_operand.vmem [shape: bf16[128,4], index: 8, kind: input, shape index: {}]
  %s9 = inlined_call_operand.vmem [shape: f32[1,4], index: 9, kind: input, shape index: {}]
  %s10 = inlined_call_operand.vmem [shape: f32[16,4], index: 10, kind: output, shape index: {}]
  %s11 = sld [smem:[#allocation0]]
  $region58: #{tpu_custom_call.1} parent=0
    _
  %s13 = ssub.s32 1, %s11
  %s14 = scalar_select 0, %s13, %s11
  %15 = sst [smem:[#allocation2]] %s0
  $region1: #{tpu_custom_call.1} parent=0
    #allocation3 [shape = 'u8[393216]{0}', space=vmem, size = 0x60000, scoped, tag = 'input window, operand 4, single buffered']
    #allocation4 [shape = 's32[1]{0}', space=sflag, size = 0x4, scoped, tag = 'scoped memory for tpu_custom_call.1']
    #allocation5 [shape = 'u8[98304]{0}', space=vmem, size = 0x18000, scoped, tag = 'input window, operand 6, single buffered']
    #allocation6 [shape = 's32[1]{0}', space=sflag, size = 0x4, scoped, tag = 'scoped memory for tpu_custom_call.1']
    %16 = vsyncpa [#allocation4], 0
    %17 = vsyncpa [#allocation6], 0
    // Predicated region
    $region2: #{tpu_custom_call.1} parent=1 // pred_check
      _
    $region3: #{tpu_custom_call.1} parent=1 // pred_check_branch
      %19 = sbr.rel (0) target = $region5
    $region4: #{tpu_custom_call.1} parent=1 // pred_region
      _
    $region5: #{tpu_custom_call.1} parent=1 // pred_fallthru
      _
    // Predicated region
    $region6: #{tpu_custom_call.1} parent=1 // pred_check
      _
    $region7: #{tpu_custom_call.1} parent=1 // pred_check_branch
      %21 = sbr.rel (0) target = $region9
    $region8: #{tpu_custom_call.1} parent=1 // pred_region
      _
    $region9: #{tpu_custom_call.1} parent=1 // pred_fallthru
      _
    // Predicated region
    $region10: #{tpu_custom_call.1} parent=1 // pred_check
      _
    $region11: #{tpu_custom_call.1} parent=1 // pred_check_branch
      %23 = sbr.rel (0) target = $region13
    $region12: #{tpu_custom_call.1} parent=1 // pred_region
      _
    $region13: #{tpu_custom_call.1} parent=1 // pred_fallthru
      _
    // Predicated region
    $region14: #{tpu_custom_call.1} parent=1 // pred_check
      _
    $region15: #{tpu_custom_call.1} parent=1 // pred_check_branch
      %25 = sbr.rel (0) target = $region17
    $region16: #{tpu_custom_call.1} parent=1 // pred_region
      _
    $region17: #{tpu_custom_call.1} parent=1 // pred_fallthru
      _
    // Predicated region
    $region18: #{tpu_custom_call.1} parent=1 // pred_check
      _
    $region19: #{tpu_custom_call.1} parent=1 // pred_check_branch
      %27 = sbr.rel (0) target = $region21
    $region20: #{tpu_custom_call.1} parent=1 // pred_region
      %s29 = ssub.s32 12288, 12288
      %30 = vsyncadd [#allocation4], %s29
      %s31 = sshll.u32 [#allocation3], 4
      %s32 = int_to_ptr.vmem [resolvable:$true] %s31
      %37 = dma.hbm_to_vmem [thread:$0]  %s4, 12288, %s32, [#allocation4], 192, 192, 12
    $region21: #{tpu_custom_call.1} parent=1 // pred_fallthru
      _
    // Predicated region
    $region22: #{tpu_custom_call.1} parent=1 // pred_check
      _
    $region23: #{tpu_custom_call.1} parent=1 // pred_check_branch
      %39 = sbr.rel (0) target = $region25
    $region24: #{tpu_custom_call.1} parent=1 // pred_region
      _
    $region25: #{tpu_custom_call.1} parent=1 // pred_fallthru
      _
    // Predicated region
    $region26: #{tpu_custom_call.1} parent=1 // pred_check
      _
    $region27: #{tpu_custom_call.1} parent=1 // pred_check_branch
      %41 = sbr.rel (0) target = $region29
    $region28: #{tpu_custom_call.1} parent=1 // pred_region
      %s43 = ssub.s32 3072, 3072
      %44 = vsyncadd [#allocation6], %s43
      %s45 = sshll.u32 [#allocation5], 4
      %s46 = int_to_ptr.vmem [resolvable:$true] %s45
      %51 = dma.hbm_to_vmem [thread:$0]  %s6, 3072, %s46, [#allocation6], 64, 64, 4
    $region29: #{tpu_custom_call.1} parent=1 // pred_fallthru
      _
    // Predicated region
    $region30: #{tpu_custom_call.1} parent=1 // pred_check
      _
    $region31: #{tpu_custom_call.1} parent=1 // pred_check_branch
      %53 = sbr.rel (0) target = $region33
    $region32: #{tpu_custom_call.1} parent=1 // pred_region
      _
    $region33: #{tpu_custom_call.1} parent=1 // pred_fallthru
      _
    // Predicated region
    $region34: #{tpu_custom_call.1} parent=1 // pred_check
      _
    $region35: #{tpu_custom_call.1} parent=1 // pred_check_branch
      %55 = sbr.rel (0) target = $region37
    $region36: #{tpu_custom_call.1} parent=1 // pred_region
      _
    $region37: #{tpu_custom_call.1} parent=1 // pred_fallthru
      _
    // Predicated region
    $region38: #{tpu_custom_call.1} parent=1 // pred_check
      _
    $region39: #{tpu_custom_call.1} parent=1 // pred_check_branch
      %57 = sbr.rel (0) target = $region41
    $region40: #{tpu_custom_call.1} parent=1 // pred_region
      _
    $region41: #{tpu_custom_call.1} parent=1 // pred_fallthru
      _
    // Predicated region
    $region42: #{tpu_custom_call.1} parent=1 // pred_check
      _
    $region43: #{tpu_custom_call.1} parent=1 // pred_check_branch
      %59 = sbr.rel (0) target = $region45
    $region44: #{tpu_custom_call.1} parent=1 // pred_region
      %60 = dma.done [#allocation4], 12288
    $region45: #{tpu_custom_call.1} parent=1 // pred_fallthru
      _
    // Predicated region
    $region46: #{tpu_custom_call.1} parent=1 // pred_check
      _
    $region47: #{tpu_custom_call.1} parent=1 // pred_check_branch
      %62 = sbr.rel (0) target = $region49
    $region48: #{tpu_custom_call.1} parent=1 // pred_region
      %63 = dma.done [#allocation6], 3072
    $region49: #{tpu_custom_call.1} parent=1 // pred_fallthru
      _
    %s65 = sld [smem:[#allocation2]]
    %v66 = vld [vmem:[%s1] sm:$0xf]
    %v67 = vld [vmem:[%s1 + $0x4] sm:$0xf]
    %v68 = vld [vmem:[%s2] sm:$0xff]
    %v69 = vld [vmem:[%s2 + $0x8] sm:$0xff]
    %v70 = vld [vmem:[%s2 + $0x10] sm:$0xff]
    %v71 = vld [vmem:[%s2 + $0x18] sm:$0xff]
    %v72 = vld [vmem:[%s3] sm:$0xf]
    %v74 = vlaneseq
    %v75 = vshrl.u32 %v74, 7
    %v76 = vsub.s32 0, %v75
    %v77 = vrot.slane %v72, %v76
    %v78 = vlaneseq
    %v79 = vshrl.u32 %v78, 7
    %v80 = vsub.s32 1, %v79
    %v81 = vrot.slane %v72, %v80
    %v82 = vlaneseq
    %v83 = vshrl.u32 %v82, 7
    %v84 = vsub.s32 2, %v83
    %v85 = vrot.slane %v72, %v84
    %v86 = vlaneseq
    %v87 = vshrl.u32 %v86, 7
    %v88 = vsub.s32 3, %v87
    %v89 = vrot.slane %v72, %v88
    %v96 = vunpack.c.l.b16 %v66
    %v97 = vunpack.c.l.b16 %v67
    %v98 = vpack.c.b16 %v97, %v96
    %v103 = vunpack.c.l.b16 %v68
    %v104 = vunpack.c.h.b16 %v68
    %v105 = vunpack.c.l.b16 %v69
    %v106 = vunpack.c.h.b16 %v69
    %v107 = vunpack.c.l.b16 %v70
    %v108 = vunpack.c.h.b16 %v70
    %v109 = vunpack.c.l.b16 %v71
    %v110 = vunpack.c.h.b16 %v71
    %v111 = vpack.c.b16 %v107, %v103
    %v112 = vpack.c.b16 %v108, %v104
    %v113 = vpack.c.b16 %v109, %v105
    %v114 = vpack.c.b16 %v110, %v106
    %vm119 = vcmask 130048
    %v121 = vsel %vm119, %v98, 0
    %123 = vmatprep.subr.bf16.mxu0 %v112
    %124 = vmatpush1.bf16.msra.mxu0 %v111
    %125 = vmatprep.subr.bf16.mxu0 0
    %126 = vmatpush1.bf16.msra.mxu0 0
    %127 = vmatprep.subr.bf16.mxu0 0
    %128 = vmatpush1.bf16.msra.mxu0 0
    %129 = vmatprep.subr.bf16.mxu0 0
    %130 = vmatpush1.bf16.msra.mxu0 0
    %131 = vmatprep.subr.bf16.mxu0 0
    %132 = vmatpush1.bf16.msra.mxu0 0
    %133 = vmatprep.subr.bf16.mxu0 0
    %134 = vmatpush1.bf16.msra.mxu0 0
    %135 = vmatprep.subr.bf16.mxu0 0
    %136 = vmatpush1.bf16.msra.mxu0 0
    %137 = vmatprep.subr.bf16.mxu0 0
    %138 = vmatpush1.bf16.msra.mxu0 0
    %139 = vmatprep.subr.bf16.mxu0 0
    %140 = vmatpush1.bf16.msra.mxu0 0
    %141 = vmatprep.subr.bf16.mxu0 0
    %142 = vmatpush1.bf16.msra.mxu0 0
    %143 = vmatprep.subr.bf16.mxu0 0
    %144 = vmatpush1.bf16.msra.mxu0 0
    %145 = vmatprep.subr.bf16.mxu0 0
    %146 = vmatpush1.bf16.msra.mxu0 0
    %147 = vmatprep.subr.bf16.mxu0 0
    %148 = vmatpush1.bf16.msra.mxu0 0
    %149 = vmatprep.subr.bf16.mxu0 0
    %150 = vmatpush1.bf16.msra.mxu0 0
    %151 = vmatprep.subr.bf16.mxu0 0
    %152 = vmatpush1.bf16.msra.mxu0 0
    %153 = vmatprep.subr.bf16.mxu0 0
    %154 = vmatpush1.bf16.msra.mxu0 0
    %155 = vmatprep.mubr.bf16.mxu0 0
    %156 = vmatmul.mubr.bf16.gmra.mrb[0].mxu0 %v121
    %v157 = vpop.f32.mrb[0].mxu0
    %v158 = vadd.f32 %v77, %v157
    %v159 = vpop.f32.mrb[0].mxu0
    %v160 = vadd.f32 %v81, %v159
    %v161 = vpop.f32.mrb[0].mxu0
    %v162 = vadd.f32 %v77, %v161
    %v163 = vpop.f32.mrb[0].mxu0
    %v164 = vadd.f32 %v81, %v163
    %165 = vdwg.mxu0
    %166 = vmatprep.subr.bf16.mxu0 %v114
    %167 = vmatpush1.bf16.msra.mxu0 %v113
    %168 = vmatprep.subr.bf16.mxu0 0
    %169 = vmatpush1.bf16.msra.mxu0 0
    %170 = vmatprep.subr.bf16.mxu0 0
    %171 = vmatpush1.bf16.msra.mxu0 0
    %172 = vmatprep.subr.bf16.mxu0 0
    %173 = vmatpush1.bf16.msra.mxu0 0
    %174 = vmatprep.subr.bf16.mxu0 0
    %175 = vmatpush1.bf16.msra.mxu0 0
    %176 = vmatprep.subr.bf16.mxu0 0
    %177 = vmatpush1.bf16.msra.mxu0 0
    %178 = vmatprep.subr.bf16.mxu0 0
    %179 = vmatpush1.bf16.msra.mxu0 0
    %180 = vmatprep.subr.bf16.mxu0 0
    %181 = vmatpush1.bf16.msra.mxu0 0
    %182 = vmatprep.subr.bf16.mxu0 0
    %183 = vmatpush1.bf16.msra.mxu0 0
    %184 = vmatprep.subr.bf16.mxu0 0
    %185 = vmatpush1.bf16.msra.mxu0 0
    %186 = vmatprep.subr.bf16.mxu0 0
    %187 = vmatpush1.bf16.msra.mxu0 0
    %188 = vmatprep.subr.bf16.mxu0 0
    %189 = vmatpush1.bf16.msra.mxu0 0
    %190 = vmatprep.subr.bf16.mxu0 0
    %191 = vmatpush1.bf16.msra.mxu0 0
    %192 = vmatprep.subr.bf16.mxu0 0
    %193 = vmatpush1.bf16.msra.mxu0 0
    %194 = vmatprep.subr.bf16.mxu0 0
    %195 = vmatpush1.bf16.msra.mxu0 0
    %196 = vmatprep.subr.bf16.mxu0 0
    %197 = vmatpush1.bf16.msra.mxu0 0
    %198 = vmatprep.mubr.bf16.mxu0 0
    %199 = vmatmul.mubr.bf16.gmra.mrb[0].mxu0 %v121
    %v200 = vpop.f32.mrb[0].mxu0
    %v201 = vadd.f32 %v85, %v200
    %v202 = vpop.f32.mrb[0].mxu0
    %v203 = vadd.f32 %v89, %v202
    %v204 = vpop.f32.mrb[0].mxu0
    %v205 = vadd.f32 %v85, %v204
    %v206 = vpop.f32.mrb[0].mxu0
    %v207 = vadd.f32 %v89, %v206
    %208 = vdwg.mxu0
    %v209 = vmax.f32 %v158, 0.0
    %v210 = vmax.f32 %v160, 0.0
    %v211 = vmax.f32 %v201, 0.0
    %v212 = vmax.f32 %v203, 0.0
    %v213 = vmax.f32 %v162, 0.0
    %v214 = vmax.f32 %v164, 0.0
    %v215 = vmax.f32 %v205, 0.0
    %v216 = vmax.f32 %v207, 0.0
    %v217 = vpack.c.bf16 %v213, %v209
    %v218 = vpack.c.bf16 %v214, %v210
    %v219 = vpack.c.bf16 %v215, %v211
    %v220 = vpack.c.bf16 %v216, %v212
    %v221 = vld [vmem:[#allocation3] sm:$0xff]
    %v222 = vld [vmem:[#allocation3 + $0x8] sm:$0xf]
    %v223 = vld [vmem:[#allocation3 + $0xc] sm:$0xff]
    %v224 = vld [vmem:[#allocation3 + $0x14] sm:$0xf]
    %v225 = vld [vmem:[#allocation3 + $0x18] sm:$0xff]
    %v226 = vld [vmem:[#allocation3 + $0x20] sm:$0xf]
    %v227 = vld [vmem:[#allocation3 + $0x24] sm:$0xff]
    %v228 = vld [vmem:[#allocation3 + $0x2c] sm:$0xf]
    %v229 = vld [vmem:[#allocation3 + $0x30] sm:$0xff]
    %v230 = vld [vmem:[#allocation3 + $0x38] sm:$0xf]
    %v231 = vld [vmem:[#allocation3 + $0x3c] sm:$0xff]
    %v232 = vld [vmem:[#allocation3 + $0x44] sm:$0xf]
    %v233 = vld [vmem:[#allocation3 + $0x48] sm:$0xff]
    %v234 = vld [vmem:[#allocation3 + $0x50] sm:$0xf]
    %v235 = vld [vmem:[#allocation3 + $0x54] sm:$0xff]
    %v236 = vld [vmem:[#allocation3 + $0x5c] sm:$0xf]
    %v237 = vld [vmem:[#allocation3 + $0x60] sm:$0xff]
    %v238 = vld [vmem:[#allocation3 + $0x68] sm:$0xf]
    %v239 = vld [vmem:[#allocation3 + $0x6c] sm:$0xff]
    %v240 = vld [vmem:[#allocation3 + $0x74] sm:$0xf]
    %v241 = vld [vmem:[#allocation3 + $0x78] sm:$0xff]
    %v242 = vld [vmem:[#allocation3 + $0x80] sm:$0xf]
    %v243 = vld [vmem:[#allocation3 + $0x84] sm:$0xff]
    %v244 = vld [vmem:[#allocation3 + $0x8c] sm:$0xf]
    %v245 = vld [vmem:[#allocation3 + $0x90] sm:$0xff]
    %v246 = vld [vmem:[#allocation3 + $0x98] sm:$0xf]
    %v247 = vld [vmem:[#allocation3 + $0x9c] sm:$0xff]
    %v248 = vld [vmem:[#allocation3 + $0xa4] sm:$0xf]
    %v249 = vld [vmem:[#allocation3 + $0xa8] sm:$0xff]
    %v250 = vld [vmem:[#allocation3 + $0xb0] sm:$0xf]
    %v251 = vld [vmem:[#allocation3 + $0xb4] sm:$0xff]
    %v252 = vld [vmem:[#allocation3 + $0xbc] sm:$0xf]
    %v253 = vld [vmem:[#allocation3 + $0xc0] sm:$0xff]
    %v254 = vld [vmem:[#allocation3 + $0xc8] sm:$0xf]
    %v255 = vld [vmem:[#allocation3 + $0xcc] sm:$0xff]
    %v256 = vld [vmem:[#allocation3 + $0xd4] sm:$0xf]
    %v257 = vld [vmem:[#allocation3 + $0xd8] sm:$0xff]
    %v258 = vld [vmem:[#allocation3 + $0xe0] sm:$0xf]
    %v259 = vld [vmem:[#allocation3 + $0xe4] sm:$0xff]
    %v260 = vld [vmem:[#allocation3 + $0xec] sm:$0xf]
    %v261 = vld [vmem:[#allocation3 + $0xf0] sm:$0xff]
    %v262 = vld [vmem:[#allocation3 + $0xf8] sm:$0xf]
    %v263 = vld [vmem:[#allocation3 + $0xfc] sm:$0xff]
    %v264 = vld [vmem:[#allocation3 + $0x104] sm:$0xf]
    %v265 = vld [vmem:[#allocation3 + $0x108] sm:$0xff]
    %v266 = vld [vmem:[#allocation3 + $0x110] sm:$0xf]
    %v267 = vld [vmem:[#allocation3 + $0x114] sm:$0xff]
    %v268 = vld [vmem:[#allocation3 + $0x11c] sm:$0xf]
    %v269 = vld [vmem:[#allocation3 + $0x120] sm:$0xff]
    %v270 = vld [vmem:[#allocation3 + $0x128] sm:$0xf]
    %v271 = vld [vmem:[#allocation3 + $0x12c] sm:$0xff]
    %v272 = vld [vmem:[#allocation3 + $0x134] sm:$0xf]
    %v273 = vld [vmem:[#allocation3 + $0x138] sm:$0xff]
    %v274 = vld [vmem:[#allocation3 + $0x140] sm:$0xf]
    %v275 = vld [vmem:[#allocation3 + $0x144] sm:$0xff]
    %v276 = vld [vmem:[#allocation3 + $0x14c] sm:$0xf]
    %v277 = vld [vmem:[#allocation3 + $0x150] sm:$0xff]
    %v278 = vld [vmem:[#allocation3 + $0x158] sm:$0xf]
    %v279 = vld [vmem:[#allocation3 + $0x15c] sm:$0xff]
    %v280 = vld [vmem:[#allocation3 + $0x164] sm:$0xf]
    %v281 = vld [vmem:[#allocation3 + $0x168] sm:$0xff]
    %v282 = vld [vmem:[#allocation3 + $0x170] sm:$0xf]
    %v283 = vld [vmem:[#allocation3 + $0x174] sm:$0xff]
    %v284 = vld [vmem:[#allocation3 + $0x17c] sm:$0xf]
    %v285 = vld [vmem:[#allocation3 + $0x180] sm:$0xff]
    %v286 = vld [vmem:[#allocation3 + $0x188] sm:$0xf]
    %v287 = vld [vmem:[#allocation3 + $0x18c] sm:$0xff]
    %v288 = vld [vmem:[#allocation3 + $0x194] sm:$0xf]
    %v289 = vld [vmem:[#allocation3 + $0x198] sm:$0xff]
    %v290 = vld [vmem:[#allocation3 + $0x1a0] sm:$0xf]
    %v291 = vld [vmem:[#allocation3 + $0x1a4] sm:$0xff]
    %v292 = vld [vmem:[#allocation3 + $0x1ac] sm:$0xf]
    %v293 = vld [vmem:[#allocation3 + $0x1b0] sm:$0xff]
    %v294 = vld [vmem:[#allocation3 + $0x1b8] sm:$0xf]
    %v295 = vld [vmem:[#allocation3 + $0x1bc] sm:$0xff]
    %v296 = vld [vmem:[#allocation3 + $0x1c4] sm:$0xf]
    %v297 = vld [vmem:[#allocation3 + $0x1c8] sm:$0xff]
    %v298 = vld [vmem:[#allocation3 + $0x1d0] sm:$0xf]
    %v299 = vld [vmem:[#allocation3 + $0x1d4] sm:$0xff]
    %v300 = vld [vmem:[#allocation3 + $0x1dc] sm:$0xf]
    %v301 = vld [vmem:[#allocation3 + $0x1e0] sm:$0xff]
    %v302 = vld [vmem:[#allocation3 + $0x1e8] sm:$0xf]
    %v303 = vld [vmem:[#allocation3 + $0x1ec] sm:$0xff]
    %v304 = vld [vmem:[#allocation3 + $0x1f4] sm:$0xf]
    %v305 = vld [vmem:[#allocation3 + $0x1f8] sm:$0xff]
    %v306 = vld [vmem:[#allocation3 + $0x200] sm:$0xf]
    %v307 = vld [vmem:[#allocation3 + $0x204] sm:$0xff]
    %v308 = vld [vmem:[#allocation3 + $0x20c] sm:$0xf]
    %v309 = vld [vmem:[#allocation3 + $0x210] sm:$0xff]
    %v310 = vld [vmem:[#allocation3 + $0x218] sm:$0xf]
    %v311 = vld [vmem:[#allocation3 + $0x21c] sm:$0xff]
    %v312 = vld [vmem:[#allocation3 + $0x224] sm:$0xf]
    %v313 = vld [vmem:[#allocation3 + $0x228] sm:$0xff]
    %v314 = vld [vmem:[#allocation3 + $0x230] sm:$0xf]
    %v315 = vld [vmem:[#allocation3 + $0x234] sm:$0xff]
    %v316 = vld [vmem:[#allocation3 + $0x23c] sm:$0xf]
    %v317 = vld [vmem:[#allocation3 + $0x240] sm:$0xff]
    %v318 = vld [vmem:[#allocation3 + $0x248] sm:$0xf]
    %v319 = vld [vmem:[#allocation3 + $0x24c] sm:$0xff]
    %v320 = vld [vmem:[#allocation3 + $0x254] sm:$0xf]
    %v321 = vld [vmem:[#allocation3 + $0x258] sm:$0xff]
    %v322 = vld [vmem:[#allocation3 + $0x260] sm:$0xf]
    %v323 = vld [vmem:[#allocation3 + $0x264] sm:$0xff]
    %v324 = vld [vmem:[#allocation3 + $0x26c] sm:$0xf]
    %v325 = vld [vmem:[#allocation3 + $0x270] sm:$0xff]
    %v326 = vld [vmem:[#allocation3 + $0x278] sm:$0xf]
    %v327 = vld [vmem:[#allocation3 + $0x27c] sm:$0xff]
    %v328 = vld [vmem:[#allocation3 + $0x284] sm:$0xf]
    %v329 = vld [vmem:[#allocation3 + $0x288] sm:$0xff]
    %v330 = vld [vmem:[#allocation3 + $0x290] sm:$0xf]
    %v331 = vld [vmem:[#allocation3 + $0x294] sm:$0xff]
    %v332 = vld [vmem:[#allocation3 + $0x29c] sm:$0xf]
    %v333 = vld [vmem:[#allocation3 + $0x2a0] sm:$0xff]
    %v334 = vld [vmem:[#allocation3 + $0x2a8] sm:$0xf]
    %v335 = vld [vmem:[#allocation3 + $0x2ac] sm:$0xff]
    %v336 = vld [vmem:[#allocation3 + $0x2b4] sm:$0xf]
    %v337 = vld [vmem:[#allocation3 + $0x2b8] sm:$0xff]
    %v338 = vld [vmem:[#allocation3 + $0x2c0] sm:$0xf]
    %v339 = vld [vmem:[#allocation3 + $0x2c4] sm:$0xff]
    %v340 = vld [vmem:[#allocation3 + $0x2cc] sm:$0xf]
    %v341 = vld [vmem:[#allocation3 + $0x2d0] sm:$0xff]
    %v342 = vld [vmem:[#allocation3 + $0x2d8] sm:$0xf]
    %v343 = vld [vmem:[#allocation3 + $0x2dc] sm:$0xff]
    %v344 = vld [vmem:[#allocation3 + $0x2e4] sm:$0xf]
    %v345 = vld [vmem:[#allocation3 + $0x2e8] sm:$0xff]
    %v346 = vld [vmem:[#allocation3 + $0x2f0] sm:$0xf]
    %v347 = vld [vmem:[#allocation3 + $0x2f4] sm:$0xff]
    %v348 = vld [vmem:[#allocation3 + $0x2fc] sm:$0xf]
    %v349 = vld [vmem:[%s5] sm:$0x7]
    %v351 = vlaneseq
    %v352 = vshrl.u32 %v351, 7
    %v353 = vsub.s32 0, %v352
    %v354 = vrot.slane %v349, %v353
    %v355 = vlaneseq
    %v356 = vshrl.u32 %v355, 7
    %v357 = vsub.s32 1, %v356
    %v358 = vrot.slane %v349, %v357
    %v359 = vlaneseq
    %v360 = vshrl.u32 %v359, 7
    %v361 = vsub.s32 2, %v360
    %v362 = vrot.slane %v349, %v361
    %v494 = vunpack.c.l.b16 %v221
    %v495 = vunpack.c.h.b16 %v221
    %v496 = vunpack.c.l.b16 %v222
    %v497 = vunpack.c.l.b16 %v223
    %v498 = vunpack.c.h.b16 %v223
    %v499 = vunpack.c.l.b16 %v224
    %v500 = vunpack.c.l.b16 %v225
    %v501 = vunpack.c.h.b16 %v225
    %v502 = vunpack.c.l.b16 %v226
    %v503 = vunpack.c.l.b16 %v227
    %v504 = vunpack.c.h.b16 %v227
    %v505 = vunpack.c.l.b16 %v228
    %v506 = vunpack.c.l.b16 %v229
    %v507 = vunpack.c.h.b16 %v229
    %v508 = vunpack.c.l.b16 %v230
    %v509 = vunpack.c.l.b16 %v231
    %v510 = vunpack.c.h.b16 %v231
    %v511 = vunpack.c.l.b16 %v232
    %v512 = vunpack.c.l.b16 %v233
    %v513 = vunpack.c.h.b16 %v233
    %v514 = vunpack.c.l.b16 %v234
    %v515 = vunpack.c.l.b16 %v235
    %v516 = vunpack.c.h.b16 %v235
    %v517 = vunpack.c.l.b16 %v236
    %v518 = vunpack.c.l.b16 %v237
    %v519 = vunpack.c.h.b16 %v237
    %v520 = vunpack.c.l.b16 %v238
    %v521 = vunpack.c.l.b16 %v239
    %v522 = vunpack.c.h.b16 %v239
    %v523 = vunpack.c.l.b16 %v240
    %v524 = vunpack.c.l.b16 %v241
    %v525 = vunpack.c.h.b16 %v241
    %v526 = vunpack.c.l.b16 %v242
    %v527 = vunpack.c.l.b16 %v243
    %v528 = vunpack.c.h.b16 %v243
    %v529 = vunpack.c.l.b16 %v244
    %v530 = vunpack.c.l.b16 %v245
    %v531 = vunpack.c.h.b16 %v245
    %v532 = vunpack.c.l.b16 %v246
    %v533 = vunpack.c.l.b16 %v247
    %v534 = vunpack.c.h.b16 %v247
    %v535 = vunpack.c.l.b16 %v248
    %v536 = vunpack.c.l.b16 %v249
    %v537 = vunpack.c.h.b16 %v249
    %v538 = vunpack.c.l.b16 %v250
    %v539 = vunpack.c.l.b16 %v251
    %v540 = vunpack.c.h.b16 %v251
    %v541 = vunpack.c.l.b16 %v252
    %v542 = vunpack.c.l.b16 %v253
    %v543 = vunpack.c.h.b16 %v253
    %v544 = vunpack.c.l.b16 %v254
    %v545 = vunpack.c.l.b16 %v255
    %v546 = vunpack.c.h.b16 %v255
    %v547 = vunpack.c.l.b16 %v256
    %v548 = vunpack.c.l.b16 %v257
    %v549 = vunpack.c.h.b16 %v257
    %v550 = vunpack.c.l.b16 %v258
    %v551 = vunpack.c.l.b16 %v259
    %v552 = vunpack.c.h.b16 %v259
    %v553 = vunpack.c.l.b16 %v260
    %v554 = vunpack.c.l.b16 %v261
    %v555 = vunpack.c.h.b16 %v261
    %v556 = vunpack.c.l.b16 %v262
    %v557 = vunpack.c.l.b16 %v263
    %v558 = vunpack.c.h.b16 %v263
    %v559 = vunpack.c.l.b16 %v264
    %v560 = vunpack.c.l.b16 %v265
    %v561 = vunpack.c.h.b16 %v265
    %v562 = vunpack.c.l.b16 %v266
    %v563 = vunpack.c.l.b16 %v267
    %v564 = vunpack.c.h.b16 %v267
    %v565 = vunpack.c.l.b16 %v268
    %v566 = vunpack.c.l.b16 %v269
    %v567 = vunpack.c.h.b16 %v269
    %v568 = vunpack.c.l.b16 %v270
    %v569 = vunpack.c.l.b16 %v271
    %v570 = vunpack.c.h.b16 %v271
    %v571 = vunpack.c.l.b16 %v272
    %v572 = vunpack.c.l.b16 %v273
    %v573 = vunpack.c.h.b16 %v273
    %v574 = vunpack.c.l.b16 %v274
    %v575 = vunpack.c.l.b16 %v275
    %v576 = vunpack.c.h.b16 %v275
    %v577 = vunpack.c.l.b16 %v276
    %v578 = vunpack.c.l.b16 %v277
    %v579 = vunpack.c.h.b16 %v277
    %v580 = vunpack.c.l.b16 %v278
    %v581 = vunpack.c.l.b16 %v279
    %v582 = vunpack.c.h.b16 %v279
    %v583 = vunpack.c.l.b16 %v280
    %v584 = vunpack.c.l.b16 %v281
    %v585 = vunpack.c.h.b16 %v281
    %v586 = vunpack.c.l.b16 %v282
    %v587 = vunpack.c.l.b16 %v283
    %v588 = vunpack.c.h.b16 %v283
    %v589 = vunpack.c.l.b16 %v284
    %v590 = vunpack.c.l.b16 %v285
    %v591 = vunpack.c.h.b16 %v285
    %v592 = vunpack.c.l.b16 %v286
    %v593 = vunpack.c.l.b16 %v287
    %v594 = vunpack.c.h.b16 %v287
    %v595 = vunpack.c.l.b16 %v288
    %v596 = vunpack.c.l.b16 %v289
    %v597 = vunpack.c.h.b16 %v289
    %v598 = vunpack.c.l.b16 %v290
    %v599 = vunpack.c.l.b16 %v291
    %v600 = vunpack.c.h.b16 %v291
    %v601 = vunpack.c.l.b16 %v292
    %v602 = vunpack.c.l.b16 %v293
    %v603 = vunpack.c.h.b16 %v293
    %v604 = vunpack.c.l.b16 %v294
    %v605 = vunpack.c.l.b16 %v295
    %v606 = vunpack.c.h.b16 %v295
    %v607 = vunpack.c.l.b16 %v296
    %v608 = vunpack.c.l.b16 %v297
    %v609 = vunpack.c.h.b16 %v297
    %v610 = vunpack.c.l.b16 %v298
    %v611 = vunpack.c.l.b16 %v299
    %v612 = vunpack.c.h.b16 %v299
    %v613 = vunpack.c.l.b16 %v300
    %v614 = vunpack.c.l.b16 %v301
    %v615 = vunpack.c.h.b16 %v301
    %v616 = vunpack.c.l.b16 %v302
    %v617 = vunpack.c.l.b16 %v303
    %v618 = vunpack.c.h.b16 %v303
    %v619 = vunpack.c.l.b16 %v304
    %v620 = vunpack.c.l.b16 %v305
    %v621 = vunpack.c.h.b16 %v305
    %v622 = vunpack.c.l.b16 %v306
    %v623 = vunpack.c.l.b16 %v307
    %v624 = vunpack.c.h.b16 %v307
    %v625 = vunpack.c.l.b16 %v308
    %v626 = vunpack.c.l.b16 %v309
    %v627 = vunpack.c.h.b16 %v309
    %v628 = vunpack.c.l.b16 %v310
    %v629 = vunpack.c.l.b16 %v311
    %v630 = vunpack.c.h.b16 %v311
    %v631 = vunpack.c.l.b16 %v312
    %v632 = vunpack.c.l.b16 %v313
    %v633 = vunpack.c.h.b16 %v313
    %v634 = vunpack.c.l.b16 %v314
    %v635 = vunpack.c.l.b16 %v315
    %v636 = vunpack.c.h.b16 %v315
    %v637 = vunpack.c.l.b16 %v316
    %v638 = vunpack.c.l.b16 %v317
    %v639 = vunpack.c.h.b16 %v317
    %v640 = vunpack.c.l.b16 %v318
    %v641 = vunpack.c.l.b16 %v319
    %v642 = vunpack.c.h.b16 %v319
    %v643 = vunpack.c.l.b16 %v320
    %v644 = vunpack.c.l.b16 %v321
    %v645 = vunpack.c.h.b16 %v321
    %v646 = vunpack.c.l.b16 %v322
    %v647 = vunpack.c.l.b16 %v323
    %v648 = vunpack.c.h.b16 %v323
    %v649 = vunpack.c.l.b16 %v324
    %v650 = vunpack.c.l.b16 %v325
    %v651 = vunpack.c.h.b16 %v325
    %v652 = vunpack.c.l.b16 %v326
    %v653 = vunpack.c.l.b16 %v327
    %v654 = vunpack.c.h.b16 %v327
    %v655 = vunpack.c.l.b16 %v328
    %v656 = vunpack.c.l.b16 %v329
    %v657 = vunpack.c.h.b16 %v329
    %v658 = vunpack.c.l.b16 %v330
    %v659 = vunpack.c.l.b16 %v331
    %v660 = vunpack.c.h.b16 %v331
    %v661 = vunpack.c.l.b16 %v332
    %v662 = vunpack.c.l.b16 %v333
    %v663 = vunpack.c.h.b16 %v333
    %v664 = vunpack.c.l.b16 %v334
    %v665 = vunpack.c.l.b16 %v335
    %v666 = vunpack.c.h.b16 %v335
    %v667 = vunpack.c.l.b16 %v336
    %v668 = vunpack.c.l.b16 %v337
    %v669 = vunpack.c.h.b16 %v337
    %v670 = vunpack.c.l.b16 %v338
    %v671 = vunpack.c.l.b16 %v339
    %v672 = vunpack.c.h.b16 %v339
    %v673 = vunpack.c.l.b16 %v340
    %v674 = vunpack.c.l.b16 %v341
    %v675 = vunpack.c.h.b16 %v341
    %v676 = vunpack.c.l.b16 %v342
    %v677 = vunpack.c.l.b16 %v343
    %v678 = vunpack.c.h.b16 %v343
    %v679 = vunpack.c.l.b16 %v344
    %v680 = vunpack.c.l.b16 %v345
    %v681 = vunpack.c.h.b16 %v345
    %v682 = vunpack.c.l.b16 %v346
    %v683 = vunpack.c.l.b16 %v347
    %v684 = vunpack.c.h.b16 %v347
    %v685 = vunpack.c.l.b16 %v348
    %v686 = vpack.c.b16 %v497, %v494
    %v687 = vpack.c.b16 %v498, %v495
    %v688 = vpack.c.b16 %v499, %v496
    %v689 = vpack.c.b16 %v503, %v500
    %v690 = vpack.c.b16 %v504, %v501
    %v691 = vpack.c.b16 %v505, %v502
    %v692 = vpack.c.b16 %v509, %v506
    %v693 = vpack.c.b16 %v510, %v507
    %v694 = vpack.c.b16 %v511, %v508
    %v695 = vpack.c.b16 %v515, %v512
    %v696 = vpack.c.b16 %v516, %v513
    %v697 = vpack.c.b16 %v517, %v514
    %v698 = vpack.c.b16 %v521, %v518
    %v699 = vpack.c.b16 %v522, %v519
    %v700 = vpack.c.b16 %v523, %v520
    %v701 = vpack.c.b16 %v527, %v524
    %v702 = vpack.c.b16 %v528, %v525
    %v703 = vpack.c.b16 %v529, %v526
    %v704 = vpack.c.b16 %v533, %v530
    %v705 = vpack.c.b16 %v534, %v531
    %v706 = vpack.c.b16 %v535, %v532
    %v707 = vpack.c.b16 %v539, %v536
    %v708 = vpack.c.b16 %v540, %v537
    %v709 = vpack.c.b16 %v541, %v538
    %v710 = vpack.c.b16 %v545, %v542
    %v711 = vpack.c.b16 %v546, %v543
    %v712 = vpack.c.b16 %v547, %v544
    %v713 = vpack.c.b16 %v551, %v548
    %v714 = vpack.c.b16 %v552, %v549
    %v715 = vpack.c.b16 %v553, %v550
    %v716 = vpack.c.b16 %v557, %v554
    %v717 = vpack.c.b16 %v558, %v555
    %v718 = vpack.c.b16 %v559, %v556
    %v719 = vpack.c.b16 %v563, %v560
    %v720 = vpack.c.b16 %v564, %v561
    %v721 = vpack.c.b16 %v565, %v562
    %v722 = vpack.c.b16 %v569, %v566
    %v723 = vpack.c.b16 %v570, %v567
    %v724 = vpack.c.b16 %v571, %v568
    %v725 = vpack.c.b16 %v575, %v572
    %v726 = vpack.c.b16 %v576, %v573
    %v727 = vpack.c.b16 %v577, %v574
    %v728 = vpack.c.b16 %v581, %v578
    %v729 = vpack.c.b16 %v582, %v579
    %v730 = vpack.c.b16 %v583, %v580
    %v731 = vpack.c.b16 %v587, %v584
    %v732 = vpack.c.b16 %v588, %v585
    %v733 = vpack.c.b16 %v589, %v586
    %v734 = vpack.c.b16 %v593, %v590
    %v735 = vpack.c.b16 %v594, %v591
    %v736 = vpack.c.b16 %v595, %v592
    %v737 = vpack.c.b16 %v599, %v596
    %v738 = vpack.c.b16 %v600, %v597
    %v739 = vpack.c.b16 %v601, %v598
    %v740 = vpack.c.b16 %v605, %v602
    %v741 = vpack.c.b16 %v606, %v603
    %v742 = vpack.c.b16 %v607, %v604
    %v743 = vpack.c.b16 %v611, %v608
    %v744 = vpack.c.b16 %v612, %v609
    %v745 = vpack.c.b16 %v613, %v610
    %v746 = vpack.c.b16 %v617, %v614
    %v747 = vpack.c.b16 %v618, %v615
    %v748 = vpack.c.b16 %v619, %v616
    %v749 = vpack.c.b16 %v623, %v620
    %v750 = vpack.c.b16 %v624, %v621
    %v751 = vpack.c.b16 %v625, %v622
    %v752 = vpack.c.b16 %v629, %v626
    %v753 = vpack.c.b16 %v630, %v627
    %v754 = vpack.c.b16 %v631, %v628
    %v755 = vpack.c.b16 %v635, %v632
    %v756 = vpack.c.b16 %v636, %v633
    %v757 = vpack.c.b16 %v637, %v634
    %v758 = vpack.c.b16 %v641, %v638
    %v759 = vpack.c.b16 %v642, %v639
    %v760 = vpack.c.b16 %v643, %v640
    %v761 = vpack.c.b16 %v647, %v644
    %v762 = vpack.c.b16 %v648, %v645
    %v763 = vpack.c.b16 %v649, %v646
    %v764 = vpack.c.b16 %v653, %v650
    %v765 = vpack.c.b16 %v654, %v651
    %v766 = vpack.c.b16 %v655, %v652
    %v767 = vpack.c.b16 %v659, %v656
    %v768 = vpack.c.b16 %v660, %v657
    %v769 = vpack.c.b16 %v661, %v658
    %v770 = vpack.c.b16 %v665, %v662
    %v771 = vpack.c.b16 %v666, %v663
    %v772 = vpack.c.b16 %v667, %v664
    %v773 = vpack.c.b16 %v671, %v668
    %v774 = vpack.c.b16 %v672, %v669
    %v775 = vpack.c.b16 %v673, %v670
    %v776 = vpack.c.b16 %v677, %v674
    %v777 = vpack.c.b16 %v678, %v675
    %v778 = vpack.c.b16 %v679, %v676
    %v779 = vpack.c.b16 %v683, %v680
    %v780 = vpack.c.b16 %v684, %v681
    %v781 = vpack.c.b16 %v685, %v682
    %878 = vmatprep.subr.bf16.mxu0 %v687
    %879 = vmatpush1.bf16.msra.mxu0 %v686
    %880 = vmatprep.subr.bf16.mxu0 %v690
    %881 = vmatpush1.bf16.msra.mxu0 %v689
    %882 = vmatprep.subr.bf16.mxu0 %v693
    %883 = vmatpush1.bf16.msra.mxu0 %v692
    %884 = vmatprep.subr.bf16.mxu0 %v696
    %885 = vmatpush1.bf16.msra.mxu0 %v695
    %886 = vmatprep.subr.bf16.mxu0 %v699
    %887 = vmatpush1.bf16.msra.mxu0 %v698
    %888 = vmatprep.subr.bf16.mxu0 %v702
    %889 = vmatpush1.bf16.msra.mxu0 %v701
    %890 = vmatprep.subr.bf16.mxu0 %v705
    %891 = vmatpush1.bf16.msra.mxu0 %v704
    %892 = vmatprep.subr.bf16.mxu0 %v708
    %893 = vmatpush1.bf16.msra.mxu0 %v707
    %894 = vmatprep.subr.bf16.mxu0 %v711
    %895 = vmatpush1.bf16.msra.mxu0 %v710
    %896 = vmatprep.subr.bf16.mxu0 %v714
    %897 = vmatpush1.bf16.msra.mxu0 %v713
    %898 = vmatprep.subr.bf16.mxu0 %v717
    %899 = vmatpush1.bf16.msra.mxu0 %v716
    %900 = vmatprep.subr.bf16.mxu0 %v720
    %901 = vmatpush1.bf16.msra.mxu0 %v719
    %902 = vmatprep.subr.bf16.mxu0 %v723
    %903 = vmatpush1.bf16.msra.mxu0 %v722
    %904 = vmatprep.subr.bf16.mxu0 %v726
    %905 = vmatpush1.bf16.msra.mxu0 %v725
    %906 = vmatprep.subr.bf16.mxu0 %v729
    %907 = vmatpush1.bf16.msra.mxu0 %v728
    %908 = vmatprep.subr.bf16.mxu0 %v732
    %909 = vmatpush1.bf16.msra.mxu0 %v731
    %910 = vmatprep.mubr.bf16.mxu0 %v218
    %911 = vmatmul.mubr.bf16.gmra.mrb[0].mxu0 %v217
    %v912 = vpop.f32.mrb[0].mxu0
    %v913 = vadd.f32 %v354, %v912
    %v914 = vpop.f32.mrb[0].mxu0
    %v915 = vadd.f32 %v358, %v914
    %v916 = vpop.f32.mrb[0].mxu0
    %v917 = vadd.f32 %v354, %v916
    %v918 = vpop.f32.mrb[0].mxu0
    %v919 = vadd.f32 %v358, %v918
    %920 = vdwg.mxu0
    %921 = vmatprep.subr.bf16.mxu0 %v735
    %922 = vmatpush1.bf16.msra.mxu0 %v734
    %923 = vmatprep.subr.bf16.mxu0 %v738
    %924 = vmatpush1.bf16.msra.mxu0 %v737
    %925 = vmatprep.subr.bf16.mxu0 %v741
    %926 = vmatpush1.bf16.msra.mxu0 %v740
    %927 = vmatprep.subr.bf16.mxu0 %v744
    %928 = vmatpush1.bf16.msra.mxu0 %v743
    %929 = vmatprep.subr.bf16.mxu0 %v747
    %930 = vmatpush1.bf16.msra.mxu0 %v746
    %931 = vmatprep.subr.bf16.mxu0 %v750
    %932 = vmatpush1.bf16.msra.mxu0 %v749
    %933 = vmatprep.subr.bf16.mxu0 %v753
    %934 = vmatpush1.bf16.msra.mxu0 %v752
    %935 = vmatprep.subr.bf16.mxu0 %v756
    %936 = vmatpush1.bf16.msra.mxu0 %v755
    %937 = vmatprep.subr.bf16.mxu0 %v759
    %938 = vmatpush1.bf16.msra.mxu0 %v758
    %939 = vmatprep.subr.bf16.mxu0 %v762
    %940 = vmatpush1.bf16.msra.mxu0 %v761
    %941 = vmatprep.subr.bf16.mxu0 %v765
    %942 = vmatpush1.bf16.msra.mxu0 %v764
    %943 = vmatprep.subr.bf16.mxu0 %v768
    %944 = vmatpush1.bf16.msra.mxu0 %v767
    %945 = vmatprep.subr.bf16.mxu0 %v771
    %946 = vmatpush1.bf16.msra.mxu0 %v770
    %947 = vmatprep.subr.bf16.mxu0 %v774
    %948 = vmatpush1.bf16.msra.mxu0 %v773
    %949 = vmatprep.subr.bf16.mxu0 %v777
    %950 = vmatpush1.bf16.msra.mxu0 %v776
    %951 = vmatprep.subr.bf16.mxu0 %v780
    %952 = vmatpush1.bf16.msra.mxu0 %v779
    %953 = vmatprep.mubr.bf16.mxu0 %v220
    %954 = vmatmul.mubr.bf16.gmra.mrb[0].mxu0 %v219
    %v955 = vpop.f32.mrb[0].mxu0
    %v956 = vadd.f32 %v913, %v955
    %v957 = vpop.f32.mrb[0].mxu0
    %v958 = vadd.f32 %v915, %v957
    %v959 = vpop.f32.mrb[0].mxu0
    %v960 = vadd.f32 %v917, %v959
    %v961 = vpop.f32.mrb[0].mxu0
    %v962 = vadd.f32 %v919, %v961
    %963 = vdwg.mxu0
    %964 = vmatprep.subr.bf16.mxu0 0
    %965 = vmatpush1.bf16.msra.mxu0 %v688
    %966 = vmatprep.subr.bf16.mxu0 0
    %967 = vmatpush1.bf16.msra.mxu0 %v691
    %968 = vmatprep.subr.bf16.mxu0 0
    %969 = vmatpush1.bf16.msra.mxu0 %v694
    %970 = vmatprep.subr.bf16.mxu0 0
    %971 = vmatpush1.bf16.msra.mxu0 %v697
    %972 = vmatprep.subr.bf16.mxu0 0
    %973 = vmatpush1.bf16.msra.mxu0 %v700
    %974 = vmatprep.subr.bf16.mxu0 0
    %975 = vmatpush1.bf16.msra.mxu0 %v703
    %976 = vmatprep.subr.bf16.mxu0 0
    %977 = vmatpush1.bf16.msra.mxu0 %v706
    %978 = vmatprep.subr.bf16.mxu0 0
    %979 = vmatpush1.bf16.msra.mxu0 %v709
    %980 = vmatprep.subr.bf16.mxu0 0
    %981 = vmatpush1.bf16.msra.mxu0 %v712
    %982 = vmatprep.subr.bf16.mxu0 0
    %983 = vmatpush1.bf16.msra.mxu0 %v715
    %984 = vmatprep.subr.bf16.mxu0 0
    %985 = vmatpush1.bf16.msra.mxu0 %v718
    %986 = vmatprep.subr.bf16.mxu0 0
    %987 = vmatpush1.bf16.msra.mxu0 %v721
    %988 = vmatprep.subr.bf16.mxu0 0
    %989 = vmatpush1.bf16.msra.mxu0 %v724
    %990 = vmatprep.subr.bf16.mxu0 0
    %991 = vmatpush1.bf16.msra.mxu0 %v727
    %992 = vmatprep.subr.bf16.mxu0 0
    %993 = vmatpush1.bf16.msra.mxu0 %v730
    %994 = vmatprep.subr.bf16.mxu0 0
    %995 = vmatpush1.bf16.msra.mxu0 %v733
    %996 = vmatprep.mubr.bf16.mxu0 %v218
    %997 = vmatmul.mubr.bf16.gmra.mrb[0].mxu0 %v217
    %v998 = vpop.f32.mrb[0].mxu0
    %v999 = vadd.f32 %v362, %v998
    %v1000 = vpop.f32.mrb[0].mxu0
    %v1001 = vpop.f32.mrb[0].mxu0
    %v1002 = vadd.f32 %v362, %v1001
    %v1003 = vpop.f32.mrb[0].mxu0
    %1004 = vdwg.mxu0
    %1005 = vmatprep.subr.bf16.mxu0 0
    %1006 = vmatpush1.bf16.msra.mxu0 %v736
    %1007 = vmatprep.subr.bf16.mxu0 0
    %1008 = vmatpush1.bf16.msra.mxu0 %v739
    %1009 = vmatprep.subr.bf16.mxu0 0
    %1010 = vmatpush1.bf16.msra.mxu0 %v742
    %1011 = vmatprep.subr.bf16.mxu0 0
    %1012 = vmatpush1.bf16.msra.mxu0 %v745
    %1013 = vmatprep.subr.bf16.mxu0 0
    %1014 = vmatpush1.bf16.msra.mxu0 %v748
    %1015 = vmatprep.subr.bf16.mxu0 0
    %1016 = vmatpush1.bf16.msra.mxu0 %v751
    %1017 = vmatprep.subr.bf16.mxu0 0
    %1018 = vmatpush1.bf16.msra.mxu0 %v754
    %1019 = vmatprep.subr.bf16.mxu0 0
    %1020 = vmatpush1.bf16.msra.mxu0 %v757
    %1021 = vmatprep.subr.bf16.mxu0 0
    %1022 = vmatpush1.bf16.msra.mxu0 %v760
    %1023 = vmatprep.subr.bf16.mxu0 0
    %1024 = vmatpush1.bf16.msra.mxu0 %v763
    %1025 = vmatprep.subr.bf16.mxu0 0
    %1026 = vmatpush1.bf16.msra.mxu0 %v766
    %1027 = vmatprep.subr.bf16.mxu0 0
    %1028 = vmatpush1.bf16.msra.mxu0 %v769
    %1029 = vmatprep.subr.bf16.mxu0 0
    %1030 = vmatpush1.bf16.msra.mxu0 %v772
    %1031 = vmatprep.subr.bf16.mxu0 0
    %1032 = vmatpush1.bf16.msra.mxu0 %v775
    %1033 = vmatprep.subr.bf16.mxu0 0
    %1034 = vmatpush1.bf16.msra.mxu0 %v778
    %1035 = vmatprep.subr.bf16.mxu0 0
    %1036 = vmatpush1.bf16.msra.mxu0 %v781
    %1037 = vmatprep.mubr.bf16.mxu0 %v220
    %1038 = vmatmul.mubr.bf16.gmra.mrb[0].mxu0 %v219
    %v1039 = vpop.f32.mrb[0].mxu0
    %v1040 = vadd.f32 %v999, %v1039
    %v1041 = vpop.f32.mrb[0].mxu0
    %v1042 = vpop.f32.mrb[0].mxu0
    %v1043 = vadd.f32 %v1002, %v1042
    %v1044 = vpop.f32.mrb[0].mxu0
    %1045 = vdwg.mxu0
    %v1046 = vmax.f32 %v956, 0.0
    %v1047 = vmax.f32 %v958, 0.0
    %v1048 = vmax.f32 %v1040, 0.0
    %v1049 = vmax.f32 %v960, 0.0
    %v1050 = vmax.f32 %v962, 0.0
    %v1051 = vmax.f32 %v1043, 0.0
    %v1052 = vpack.c.bf16 %v1049, %v1046
    %v1053 = vpack.c.bf16 %v1050, %v1047
    %v1054 = vpack.c.bf16 %v1051, %v1048
    %v1055 = vld [vmem:[#allocation5] sm:$0xf]
    %v1056 = vld [vmem:[#allocation5 + $0x4] sm:$0xf]
    %v1057 = vld [vmem:[#allocation5 + $0x8] sm:$0xf]
    %v1058 = vld [vmem:[#allocation5 + $0xc] sm:$0xf]
    %v1059 = vld [vmem:[#allocation5 + $0x10] sm:$0xf]
    %v1060 = vld [vmem:[#allocation5 + $0x14] sm:$0xf]
    %v1061 = vld [vmem:[#allocation5 + $0x18] sm:$0xf]
    %v1062 = vld [vmem:[#allocation5 + $0x1c] sm:$0xf]
    %v1063 = vld [vmem:[#allocation5 + $0x20] sm:$0xf]
    %v1064 = vld [vmem:[#allocation5 + $0x24] sm:$0xf]
    %v1065 = vld [vmem:[#allocation5 + $0x28] sm:$0xf]
    %v1066 = vld [vmem:[#allocation5 + $0x2c] sm:$0xf]
    %v1067 = vld [vmem:[#allocation5 + $0x30] sm:$0xf]
    %v1068 = vld [vmem:[#allocation5 + $0x34] sm:$0xf]
    %v1069 = vld [vmem:[#allocation5 + $0x38] sm:$0xf]
    %v1070 = vld [vmem:[#allocation5 + $0x3c] sm:$0xf]
    %v1071 = vld [vmem:[#allocation5 + $0x40] sm:$0xf]
    %v1072 = vld [vmem:[#allocation5 + $0x44] sm:$0xf]
    %v1073 = vld [vmem:[#allocation5 + $0x48] sm:$0xf]
    %v1074 = vld [vmem:[#allocation5 + $0x4c] sm:$0xf]
    %v1075 = vld [vmem:[#allocation5 + $0x50] sm:$0xf]
    %v1076 = vld [vmem:[#allocation5 + $0x54] sm:$0xf]
    %v1077 = vld [vmem:[#allocation5 + $0x58] sm:$0xf]
    %v1078 = vld [vmem:[#allocation5 + $0x5c] sm:$0xf]
    %v1079 = vld [vmem:[#allocation5 + $0x60] sm:$0xf]
    %v1080 = vld [vmem:[#allocation5 + $0x64] sm:$0xf]
    %v1081 = vld [vmem:[#allocation5 + $0x68] sm:$0xf]
    %v1082 = vld [vmem:[#allocation5 + $0x6c] sm:$0xf]
    %v1083 = vld [vmem:[#allocation5 + $0x70] sm:$0xf]
    %v1084 = vld [vmem:[#allocation5 + $0x74] sm:$0xf]
    %v1085 = vld [vmem:[#allocation5 + $0x78] sm:$0xf]
    %v1086 = vld [vmem:[#allocation5 + $0x7c] sm:$0xf]
    %v1087 = vld [vmem:[#allocation5 + $0x80] sm:$0xf]
    %v1088 = vld [vmem:[#allocation5 + $0x84] sm:$0xf]
    %v1089 = vld [vmem:[#allocation5 + $0x88] sm:$0xf]
    %v1090 = vld [vmem:[#allocation5 + $0x8c] sm:$0xf]
    %v1091 = vld [vmem:[#allocation5 + $0x90] sm:$0xf]
    %v1092 = vld [vmem:[#allocation5 + $0x94] sm:$0xf]
    %v1093 = vld [vmem:[#allocation5 + $0x98] sm:$0xf]
    %v1094 = vld [vmem:[#allocation5 + $0x9c] sm:$0xf]
    %v1095 = vld [vmem:[#allocation5 + $0xa0] sm:$0xf]
    %v1096 = vld [vmem:[#allocation5 + $0xa4] sm:$0xf]
    %v1097 = vld [vmem:[#allocation5 + $0xa8] sm:$0xf]
    %v1098 = vld [vmem:[#allocation5 + $0xac] sm:$0xf]
    %v1099 = vld [vmem:[#allocation5 + $0xb0] sm:$0xf]
    %v1100 = vld [vmem:[#allocation5 + $0xb4] sm:$0xf]
    %v1101 = vld [vmem:[#allocation5 + $0xb8] sm:$0xf]
    %v1102 = vld [vmem:[#allocation5 + $0xbc] sm:$0xf]
    %v1103 = vld [vmem:[%s7] sm:$0x1]
    %v1105 = vlaneseq
    %v1106 = vshrl.u32 %v1105, 7
    %v1107 = vsub.s32 0, %v1106
    %v1108 = vrot.slane %v1103, %v1107
    %v1158 = vunpack.c.l.b16 %v1055
    %v1159 = vunpack.c.l.b16 %v1056
    %v1160 = vunpack.c.l.b16 %v1057
    %v1161 = vunpack.c.l.b16 %v1058
    %v1162 = vunpack.c.l.b16 %v1059
    %v1163 = vunpack.c.l.b16 %v1060
    %v1164 = vunpack.c.l.b16 %v1061
    %v1165 = vunpack.c.l.b16 %v1062
    %v1166 = vunpack.c.l.b16 %v1063
    %v1167 = vunpack.c.l.b16 %v1064
    %v1168 = vunpack.c.l.b16 %v1065
    %v1169 = vunpack.c.l.b16 %v1066
    %v1170 = vunpack.c.l.b16 %v1067
    %v1171 = vunpack.c.l.b16 %v1068
    %v1172 = vunpack.c.l.b16 %v1069
    %v1173 = vunpack.c.l.b16 %v1070
    %v1174 = vunpack.c.l.b16 %v1071
    %v1175 = vunpack.c.l.b16 %v1072
    %v1176 = vunpack.c.l.b16 %v1073
    %v1177 = vunpack.c.l.b16 %v1074
    %v1178 = vunpack.c.l.b16 %v1075
    %v1179 = vunpack.c.l.b16 %v1076
    %v1180 = vunpack.c.l.b16 %v1077
    %v1181 = vunpack.c.l.b16 %v1078
    %v1182 = vunpack.c.l.b16 %v1079
    %v1183 = vunpack.c.l.b16 %v1080
    %v1184 = vunpack.c.l.b16 %v1081
    %v1185 = vunpack.c.l.b16 %v1082
    %v1186 = vunpack.c.l.b16 %v1083
    %v1187 = vunpack.c.l.b16 %v1084
    %v1188 = vunpack.c.l.b16 %v1085
    %v1189 = vunpack.c.l.b16 %v1086
    %v1190 = vunpack.c.l.b16 %v1087
    %v1191 = vunpack.c.l.b16 %v1088
    %v1192 = vunpack.c.l.b16 %v1089
    %v1193 = vunpack.c.l.b16 %v1090
    %v1194 = vunpack.c.l.b16 %v1091
    %v1195 = vunpack.c.l.b16 %v1092
    %v1196 = vunpack.c.l.b16 %v1093
    %v1197 = vunpack.c.l.b16 %v1094
    %v1198 = vunpack.c.l.b16 %v1095
    %v1199 = vunpack.c.l.b16 %v1096
    %v1200 = vunpack.c.l.b16 %v1097
    %v1201 = vunpack.c.l.b16 %v1098
    %v1202 = vunpack.c.l.b16 %v1099
    %v1203 = vunpack.c.l.b16 %v1100
    %v1204 = vunpack.c.l.b16 %v1101
    %v1205 = vunpack.c.l.b16 %v1102
    %v1206 = vpack.c.b16 %v1159, %v1158
    %v1207 = vpack.c.b16 %v1161, %v1160
    %v1208 = vpack.c.b16 %v1163, %v1162
    %v1209 = vpack.c.b16 %v1165, %v1164
    %v1210 = vpack.c.b16 %v1167, %v1166
    %v1211 = vpack.c.b16 %v1169, %v1168
    %v1212 = vpack.c.b16 %v1171, %v1170
    %v1213 = vpack.c.b16 %v1173, %v1172
    %v1214 = vpack.c.b16 %v1175, %v1174
    %v1215 = vpack.c.b16 %v1177, %v1176
    %v1216 = vpack.c.b16 %v1179, %v1178
    %v1217 = vpack.c.b16 %v1181, %v1180
    %v1218 = vpack.c.b16 %v1183, %v1182
    %v1219 = vpack.c.b16 %v1185, %v1184
    %v1220 = vpack.c.b16 %v1187, %v1186
    %v1221 = vpack.c.b16 %v1189, %v1188
    %v1222 = vpack.c.b16 %v1191, %v1190
    %v1223 = vpack.c.b16 %v1193, %v1192
    %v1224 = vpack.c.b16 %v1195, %v1194
    %v1225 = vpack.c.b16 %v1197, %v1196
    %v1226 = vpack.c.b16 %v1199, %v1198
    %v1227 = vpack.c.b16 %v1201, %v1200
    %v1228 = vpack.c.b16 %v1203, %v1202
    %v1229 = vpack.c.b16 %v1205, %v1204
    %1254 = vmatprep.subr.bf16.mxu0 0
    %1255 = vmatpush1.bf16.msra.mxu0 %v1206
    %1256 = vmatprep.subr.bf16.mxu0 0
    %1257 = vmatpush1.bf16.msra.mxu0 %v1207
    %1258 = vmatprep.subr.bf16.mxu0 0
    %1259 = vmatpush1.bf16.msra.mxu0 %v1208
    %1260 = vmatprep.subr.bf16.mxu0 0
    %1261 = vmatpush1.bf16.msra.mxu0 %v1209
    %1262 = vmatprep.subr.bf16.mxu0 0
    %1263 = vmatpush1.bf16.msra.mxu0 %v1210
    %1264 = vmatprep.subr.bf16.mxu0 0
    %1265 = vmatpush1.bf16.msra.mxu0 %v1211
    %1266 = vmatprep.subr.bf16.mxu0 0
    %1267 = vmatpush1.bf16.msra.mxu0 %v1212
    %1268 = vmatprep.subr.bf16.mxu0 0
    %1269 = vmatpush1.bf16.msra.mxu0 %v1213
    %1270 = vmatprep.subr.bf16.mxu0 0
    %1271 = vmatpush1.bf16.msra.mxu0 %v1214
    %1272 = vmatprep.subr.bf16.mxu0 0
    %1273 = vmatpush1.bf16.msra.mxu0 %v1215
    %1274 = vmatprep.subr.bf16.mxu0 0
    %1275 = vmatpush1.bf16.msra.mxu0 %v1216
    %1276 = vmatprep.subr.bf16.mxu0 0
    %1277 = vmatpush1.bf16.msra.mxu0 %v1217
    %1278 = vmatprep.subr.bf16.mxu0 0
    %1279 = vmatpush1.bf16.msra.mxu0 %v1218
    %1280 = vmatprep.subr.bf16.mxu0 0
    %1281 = vmatpush1.bf16.msra.mxu0 %v1219
    %1282 = vmatprep.subr.bf16.mxu0 0
    %1283 = vmatpush1.bf16.msra.mxu0 %v1220
    %1284 = vmatprep.subr.bf16.mxu0 0
    %1285 = vmatpush1.bf16.msra.mxu0 %v1221
    %1286 = vmatprep.mubr.bf16.mxu0 %v1053
    %1287 = vmatmul.mubr.bf16.gmra.mrb[0].mxu0 %v1052
    %v1288 = vpop.f32.mrb[0].mxu0
    %v1289 = vadd.f32 %v1108, %v1288
    %v1290 = vpop.f32.mrb[0].mxu0
    %v1291 = vpop.f32.mrb[0].mxu0
    %v1292 = vadd.f32 %v1108, %v1291
    %v1293 = vpop.f32.mrb[0].mxu0
    %1294 = vdwg.mxu0
    %1295 = vmatprep.subr.bf16.mxu0 0
    %1296 = vmatpush1.bf16.msra.mxu0 %v1222
    %1297 = vmatprep.subr.bf16.mxu0 0
    %1298 = vmatpush1.bf16.msra.mxu0 %v1223
    %1299 = vmatprep.subr.bf16.mxu0 0
    %1300 = vmatpush1.bf16.msra.mxu0 %v1224
    %1301 = vmatprep.subr.bf16.mxu0 0
    %1302 = vmatpush1.bf16.msra.mxu0 %v1225
    %1303 = vmatprep.subr.bf16.mxu0 0
    %1304 = vmatpush1.bf16.msra.mxu0 %v1226
    %1305 = vmatprep.subr.bf16.mxu0 0
    %1306 = vmatpush1.bf16.msra.mxu0 %v1227
    %1307 = vmatprep.subr.bf16.mxu0 0
    %1308 = vmatpush1.bf16.msra.mxu0 %v1228
    %1309 = vmatprep.subr.bf16.mxu0 0
    %1310 = vmatpush1.bf16.msra.mxu0 %v1229
    %1311 = vmatprep.subr.bf16.mxu0 0
    %1312 = vmatpush1.bf16.msra.mxu0 0
    %1313 = vmatprep.subr.bf16.mxu0 0
    %1314 = vmatpush1.bf16.msra.mxu0 0
    %1315 = vmatprep.subr.bf16.mxu0 0
    %1316 = vmatpush1.bf16.msra.mxu0 0
    %1317 = vmatprep.subr.bf16.mxu0 0
    %1318 = vmatpush1.bf16.msra.mxu0 0
    %1319 = vmatprep.subr.bf16.mxu0 0
    %1320 = vmatpush1.bf16.msra.mxu0 0
    %1321 = vmatprep.subr.bf16.mxu0 0
    %1322 = vmatpush1.bf16.msra.mxu0 0
    %1323 = vmatprep.subr.bf16.mxu0 0
    %1324 = vmatpush1.bf16.msra.mxu0 0
    %1325 = vmatprep.subr.bf16.mxu0 0
    %1326 = vmatpush1.bf16.msra.mxu0 0
    %1327 = vmatprep.mubr.bf16.mxu0 0
    %1328 = vmatmul.mubr.bf16.gmra.mrb[0].mxu0 %v1054
    %v1329 = vpop.f32.mrb[0].mxu0
    %v1330 = vadd.f32 %v1289, %v1329
    %v1331 = vpop.f32.mrb[0].mxu0
    %v1332 = vpop.f32.mrb[0].mxu0
    %v1333 = vadd.f32 %v1292, %v1332
    %v1334 = vpop.f32.mrb[0].mxu0
    %1335 = vdwg.mxu0
    %v1336 = vmax.f32 %v1330, 0.0
    %v1337 = vmax.f32 %v1333, 0.0
    %v1338 = vpack.c.bf16 %v1337, %v1336
    %v1339 = vld [vmem:[%s8] sm:$0xf]
    %v1340 = vld [vmem:[%s8 + $0x4] sm:$0xf]
    %v1341 = vld [vmem:[%s8 + $0x8] sm:$0xf]
    %v1342 = vld [vmem:[%s8 + $0xc] sm:$0xf]
    %v1343 = vld [vmem:[%s8 + $0x10] sm:$0xf]
    %v1344 = vld [vmem:[%s8 + $0x14] sm:$0xf]
    %v1345 = vld [vmem:[%s8 + $0x18] sm:$0xf]
    %v1346 = vld [vmem:[%s8 + $0x1c] sm:$0xf]
    %v1347 = vld [vmem:[%s8 + $0x20] sm:$0xf]
    %v1348 = vld [vmem:[%s8 + $0x24] sm:$0xf]
    %v1349 = vld [vmem:[%s8 + $0x28] sm:$0xf]
    %v1350 = vld [vmem:[%s8 + $0x2c] sm:$0xf]
    %v1351 = vld [vmem:[%s8 + $0x30] sm:$0xf]
    %v1352 = vld [vmem:[%s8 + $0x34] sm:$0xf]
    %v1353 = vld [vmem:[%s8 + $0x38] sm:$0xf]
    %v1354 = vld [vmem:[%s8 + $0x3c] sm:$0xf]
    %v1355 = vld [vmem:[%s9] sm:$0x1]
    %v1357 = vlaneseq
    %v1358 = vshrl.u32 %v1357, 7
    %v1359 = vsub.s32 0, %v1358
    %v1360 = vrot.slane %v1355, %v1359
    %v1378 = vunpack.c.l.b16 %v1339
    %v1379 = vunpack.c.l.b16 %v1340
    %v1380 = vunpack.c.l.b16 %v1341
    %v1381 = vunpack.c.l.b16 %v1342
    %v1382 = vunpack.c.l.b16 %v1343
    %v1383 = vunpack.c.l.b16 %v1344
    %v1384 = vunpack.c.l.b16 %v1345
    %v1385 = vunpack.c.l.b16 %v1346
    %v1386 = vunpack.c.l.b16 %v1347
    %v1387 = vunpack.c.l.b16 %v1348
    %v1388 = vunpack.c.l.b16 %v1349
    %v1389 = vunpack.c.l.b16 %v1350
    %v1390 = vunpack.c.l.b16 %v1351
    %v1391 = vunpack.c.l.b16 %v1352
    %v1392 = vunpack.c.l.b16 %v1353
    %v1393 = vunpack.c.l.b16 %v1354
    %v1394 = vpack.c.b16 %v1379, %v1378
    %v1395 = vpack.c.b16 %v1381, %v1380
    %v1396 = vpack.c.b16 %v1383, %v1382
    %v1397 = vpack.c.b16 %v1385, %v1384
    %v1398 = vpack.c.b16 %v1387, %v1386
    %v1399 = vpack.c.b16 %v1389, %v1388
    %v1400 = vpack.c.b16 %v1391, %v1390
    %v1401 = vpack.c.b16 %v1393, %v1392
    %1410 = vmatprep.subr.bf16.mxu0 0
    %1411 = vmatpush1.bf16.msra.mxu0 %v1394
    %1412 = vmatprep.subr.bf16.mxu0 0
    %1413 = vmatpush1.bf16.msra.mxu0 %v1395
    %1414 = vmatprep.subr.bf16.mxu0 0
    %1415 = vmatpush1.bf16.msra.mxu0 %v1396
    %1416 = vmatprep.subr.bf16.mxu0 0
    %1417 = vmatpush1.bf16.msra.mxu0 %v1397
    %1418 = vmatprep.subr.bf16.mxu0 0
    %1419 = vmatpush1.bf16.msra.mxu0 %v1398
    %1420 = vmatprep.subr.bf16.mxu0 0
    %1421 = vmatpush1.bf16.msra.mxu0 %v1399
    %1422 = vmatprep.subr.bf16.mxu0 0
    %1423 = vmatpush1.bf16.msra.mxu0 %v1400
    %1424 = vmatprep.subr.bf16.mxu0 0
    %1425 = vmatpush1.bf16.msra.mxu0 %v1401
    %1426 = vmatprep.subr.bf16.mxu0 0
    %1427 = vmatpush1.bf16.msra.mxu0 0
    %1428 = vmatprep.subr.bf16.mxu0 0
    %1429 = vmatpush1.bf16.msra.mxu0 0
    %1430 = vmatprep.subr.bf16.mxu0 0
    %1431 = vmatpush1.bf16.msra.mxu0 0
    %1432 = vmatprep.subr.bf16.mxu0 0
    %1433 = vmatpush1.bf16.msra.mxu0 0
    %1434 = vmatprep.subr.bf16.mxu0 0
    %1435 = vmatpush1.bf16.msra.mxu0 0
    %1436 = vmatprep.subr.bf16.mxu0 0
    %1437 = vmatpush1.bf16.msra.mxu0 0
    %1438 = vmatprep.subr.bf16.mxu0 0
    %1439 = vmatpush1.bf16.msra.mxu0 0
    %1440 = vmatprep.subr.bf16.mxu0 0
    %1441 = vmatpush1.bf16.msra.mxu0 0
    %1442 = vmatprep.mubr.bf16.mxu0 0
    %1443 = vmatmul.mubr.bf16.gmra.mrb[0].mxu0 %v1338
    %v1444 = vpop.f32.mrb[0].mxu0
    %v1445 = vadd.f32 %v1360, %v1444
    %v1446 = vpop.f32.mrb[0].mxu0
    %v1447 = vpop.f32.mrb[0].mxu0
    %v1448 = vadd.f32 %v1360, %v1447
    %v1449 = vpop.f32.mrb[0].mxu0
    %1450 = vdwg.mxu0
    %v1451 = vtanh.pop %v1445
    %v1452 = vtanh.pop %v1448
    %v1453 = vstv %s65
    %v1454 = vmul.f32 %v1451, %v1453
    %v1455 = vmul.f32 %v1452, %v1453
    %vm1456 = vcmask 31744
    %1457 = vst.msk [vmem:[%s10] sm:$0xff] %vm1456, %v1454
    %1458 = vst.msk [vmem:[%s10 + $0x8] sm:$0xff] %vm1456, %v1455
    // Predicated region
    $region50: #{tpu_custom_call.1} parent=1 // pred_check
      _
    $region51: #{tpu_custom_call.1} parent=1 // pred_check_branch
      %1460 = sbr.rel (0) target = $region53
    $region52: #{tpu_custom_call.1} parent=1 // pred_region
      _
    $region53: #{tpu_custom_call.1} parent=1 // pred_fallthru
      _
    // Predicated region
    $region54: #{tpu_custom_call.1} parent=1 // pred_check
      _
    $region55: #{tpu_custom_call.1} parent=1 // pred_check_branch
      %1462 = sbr.rel (0) target = $region57
    $region56: #{tpu_custom_call.1} parent=1 // pred_region
      _
    $region57: #{tpu_custom_call.1} parent=1 // pred_fallthru
      _
    %1463 = vsyncpa [#allocation4], 1
    %1464 = vsyncpa [#allocation6], 1

</llo_original>
